<compile_context>
chip_gen: v7x
topology: tpu7x:2x2x1
jax: 0.10.0
libtpu: 0.0.40
codegen_flags: <defaults>
</compile_context>

<pallas_src>
import jax
import jax.numpy as jnp
from jax.experimental import pallas as pl
from jax.experimental.pallas import tpu as pltpu


def audionet_kernel(x_ref,
                    w1_ref, b1_ref,
                    w2_ref, b2_ref,
                    w3_ref, b3_ref,
                    w4t_ref, b4_ref,
                    o_ref):
    """Fused 4-layer MLP forward for one batch tile.

    x_ref:   (tb, 64)  f32  -- cast to bf16 in-kernel
    w1..w3:  bf16 weights [in, out]
    w4t_ref: (8, 64) bf16   -- row 0 = fc4 weight (transposed), rows 1..7 zero
    b1..b3:  f32 biases (1, out)
    b4_ref:  (1, 1) f32
    o_ref:   (1, tb) f32    -- lane-dense output row for this batch tile
    """
    bf = jnp.bfloat16
    x = x_ref[...].astype(bf)                                          # (tb, 64)

    h1 = jnp.dot(x, w1_ref[...], preferred_element_type=jnp.float32) + b1_ref[...]
    h1 = jnp.maximum(h1, 0.0)                                          # (tb, 128) f32

    h2 = jnp.dot(h1.astype(bf), w2_ref[...],
                 preferred_element_type=jnp.float32) + b2_ref[...]
    h2 = jnp.maximum(h2, 0.0)                                          # (tb, 256) f32

    h3 = jnp.dot(h2.astype(bf), w3_ref[...],
                 preferred_element_type=jnp.float32) + b3_ref[...]
    h3 = jnp.maximum(h3, 0.0)                                          # (tb, 64) f32

    # fc4, computed transposed so the result is already a lane-dense row:
    # (8, 64) . (tb, 64)^T -> (8, tb); only row 0 is the real output.
    out8 = jnp.einsum('od,td->ot', w4t_ref[...], h3.astype(bf),
                      preferred_element_type=jnp.float32)              # (8, tb) f32
    o_ref[...] = out8[0:1, :] + b4_ref[...]                            # (1, tb) f32


def audionet_forward(x, params, *, tb=None):
    """x: (B, 64) float32.  params: dict of f32 weights/biases (see init_params).

    Returns (B, 1) float32.
    """
    B, D_in = x.shape
    assert D_in == 64

    if tb is None:
        # Big tiles amortize per-grid-step overhead; cap keeps VMEM use small
        # (few MiB) which is safe even for v7x's smaller VMEM.
        tb = min(2048, max(128, pl.cdiv(B, 128) * 128))
    assert tb % 128 == 0, "tb must be a multiple of 128 (lane-dense output row)"

    n_tiles = pl.cdiv(B, tb)
    B_pad = n_tiles * tb
    if B_pad != B:
        # TODO(synk): replace with a masked last-tile store (or rely on Pallas
        # boundary padding) to avoid this extra pass over x when B is ragged.
        x = jnp.pad(x, ((0, B_pad - B), (0, 0)))

    # bf16 MXU operands for the weights; biases stay f32; x stays f32 (cast in-kernel).
    w1 = params["w1"].astype(jnp.bfloat16)
    w2 = params["w2"].astype(jnp.bfloat16)
    w3 = params["w3"].astype(jnp.bfloat16)
    # fc4 weight transposed to (1, 64), padded to 8 sublane rows with zeros.
    w4t = jnp.pad(params["w4"].T, ((0, 7), (0, 0))).astype(jnp.bfloat16)  # (8, 64)
    b1, b2, b3 = params["b1"], params["b2"], params["b3"]
    b4 = params["b4"]                                                     # (1, 1) f32

    # whole-array (grid-invariant) BlockSpec for weights / biases
    full = lambda arr: pl.BlockSpec(arr.shape, lambda i: (0, 0))

    flops = 2 * B_pad * (64 * 128 + 128 * 256 + 256 * 64 + 64 * 8)
    weight_bytes = 2 * (64 * 128 + 128 * 256 + 256 * 64 + 8 * 64)   # bf16
    bias_bytes = 4 * (128 + 256 + 64 + 1)
    bytes_accessed = (B_pad * 64 * 4          # x read (f32)
                      + weight_bytes + bias_bytes
                      + B_pad * 4)            # output write (1 f32 per row)
    cost = pl.CostEstimate(flops=flops, transcendentals=0,
                           bytes_accessed=bytes_accessed)

    out = pl.pallas_call(
        audionet_kernel,
        out_shape=jax.ShapeDtypeStruct((n_tiles, 1, tb), jnp.float32),
        grid_spec=pltpu.PrefetchScalarGridSpec(
            num_scalar_prefetch=0,
            grid=(n_tiles,),
            in_specs=[
                pl.BlockSpec((tb, 64), lambda i: (i, 0)),   # x tile (f32)
                full(w1), full(b1),
                full(w2), full(b2),
                full(w3), full(b3),
                full(w4t), full(b4),
            ],
            # leading grid dim squeezed; kernel sees a (1, tb) lane-dense row
            out_specs=pl.BlockSpec((None, 1, tb), lambda i: (i, 0, 0)),
        ),
        compiler_params=pltpu.CompilerParams(
            dimension_semantics=("parallel",)),
        cost_estimate=cost,
    )(x, w1, b1, w2, b2, w3, b3, w4t, b4)

    # (n_tiles, 1, tb) -> (B_pad, 1); drop the batch padding.
    return out.reshape(B_pad, 1)[:B]


def init_params(key):
    """Deterministic init mimicking PyTorch nn.Linear default (U(-1/sqrt(fan_in), +))."""
    dims = [(64, 128), (128, 256), (256, 64), (64, 1)]
    params = {}
    for idx, (fan_in, fan_out) in enumerate(dims, start=1):
        key, kw, kb = jax.random.split(key, 3)
        bound = 1.0 / (fan_in ** 0.5)
        # stored as [in, out] so the kernel does x @ W
        params[f"w{idx}"] = jax.random.uniform(
            kw, (fan_in, fan_out), jnp.float32, -bound, bound)
        params[f"b{idx}"] = jax.random.uniform(
            kb, (1, fan_out), jnp.float32, -bound, bound)
    return params


def audionet_ref(x, p):
    """Reference matching the kernel's bf16-operand / f32-accumulate semantics."""
    bf = jnp.bfloat16

    def lin(h, w, b):
        return jnp.dot(h.astype(bf), w.astype(bf),
                       preferred_element_type=jnp.float32) + b

    h = jnp.maximum(lin(x, p["w1"], p["b1"]), 0.0)
    h = jnp.maximum(lin(h, p["w2"], p["b2"]), 0.0)
    h = jnp.maximum(lin(h, p["w3"], p["b3"]), 0.0)
    return lin(h, p["w4"], p["b4"])


if __name__ == "__main__":
    key = jax.random.PRNGKey(0)
    key, kx = jax.random.split(key)

    B = 200                                  # not a multiple of tb -> exercises padding
    x = jax.random.normal(kx, (B, 64), jnp.float32)
    params = init_params(key)

    out = audionet_forward(x, params, tb=128)   # grid = (2,), lane-dense row output
    out = jax.block_until_ready(out)

    ref = audionet_ref(x, params)
    assert out.shape == (B, 1)
    assert jnp.allclose(out, ref, atol=1e-2, rtol=1e-2), "mismatch vs JAX reference"

    print("KERNEL_OK")
</pallas_src>

<mosaic_0001>
module attributes {stable_mosaic.version = 11 : i64} {
  func.func @audionet_kernel(%arg0: i32, %arg1: memref<128x64xf32, #tpu.memory_space<vmem>>, %arg2: memref<64x128xbf16, #tpu.memory_space<vmem>>, %arg3: memref<1x128xf32, #tpu.memory_space<vmem>>, %arg4: memref<128x256xbf16, #tpu.memory_space<vmem>>, %arg5: memref<1x256xf32, #tpu.memory_space<vmem>>, %arg6: memref<256x64xbf16, #tpu.memory_space<vmem>>, %arg7: memref<1x64xf32, #tpu.memory_space<vmem>>, %arg8: memref<8x64xbf16, #tpu.memory_space<vmem>>, %arg9: memref<1x1xf32, #tpu.memory_space<vmem>>, %arg10: memref<1x1x128xf32, #tpu.memory_space<vmem>>) attributes {dimension_semantics = [#tpu.dimension_semantics<parallel>], iteration_bounds = array<i64: 2>, scalar_prefetch = 0 : i64, scratch_operands = 0 : i64, tpu.core_type = #tpu.core_type<tc>, window_params = [{transform_indices = @transform_0, window_bounds = array<i64: 128, 64>}, {pipeline_mode = #tpu.pipeline_mode<synchronous>, transform_indices = @transform_1, window_bounds = array<i64: 64, 128>}, {pipeline_mode = #tpu.pipeline_mode<synchronous>, transform_indices = @transform_2, window_bounds = array<i64: 1, 128>}, {pipeline_mode = #tpu.pipeline_mode<synchronous>, transform_indices = @transform_3, window_bounds = array<i64: 128, 256>}, {pipeline_mode = #tpu.pipeline_mode<synchronous>, transform_indices = @transform_4, window_bounds = array<i64: 1, 256>}, {pipeline_mode = #tpu.pipeline_mode<synchronous>, transform_indices = @transform_5, window_bounds = array<i64: 256, 64>}, {pipeline_mode = #tpu.pipeline_mode<synchronous>, transform_indices = @transform_6, window_bounds = array<i64: 1, 64>}, {pipeline_mode = #tpu.pipeline_mode<synchronous>, transform_indices = @transform_7, window_bounds = array<i64: 8, 64>}, {pipeline_mode = #tpu.pipeline_mode<synchronous>, transform_indices = @transform_8, window_bounds = array<i64: 1, 1>}, {transform_indices = @transform_9, window_bounds = array<i64: 1, 1, 128>}]} {
    %c0 = arith.constant 0 : index
    %c0_0 = arith.constant 0 : index
    %0 = vector.load %arg1[%c0, %c0_0] : memref<128x64xf32, #tpu.memory_space<vmem>>, vector<128x64xf32>
    %1 = arith.truncf %0 : vector<128x64xf32> to vector<128x64xbf16>
    %c0_1 = arith.constant 0 : index
    %c0_2 = arith.constant 0 : index
    %2 = vector.load %arg2[%c0_1, %c0_2] : memref<64x128xbf16, #tpu.memory_space<vmem>>, vector<64x128xbf16>
    %cst = arith.constant dense<0.000000e+00> : vector<128x128xf32>
    %3 = tpu.matmul %1, %2, %cst {dimension_numbers = #tpu.dot_dimension_numbers<[1], [0], [0], [1], [0, 0, 1, 1], [], []>} : vector<128x64xbf16>, vector<64x128xbf16>, vector<128x128xf32> -> vector<128x128xf32>
    %c0_3 = arith.constant 0 : index
    %c0_4 = arith.constant 0 : index
    %4 = vector.load %arg3[%c0_3, %c0_4] : memref<1x128xf32, #tpu.memory_space<vmem>>, vector<1x128xf32>
    %5 = vector.broadcast %4 : vector<1x128xf32> to vector<128x128xf32>
    %6 = arith.addf %3, %5 : vector<128x128xf32>
    %cst_5 = arith.constant 0.000000e+00 : f32
    %7 = vector.broadcast %cst_5 : f32 to vector<128x128xf32>
    %8 = arith.maximumf %6, %7 : vector<128x128xf32>
    %9 = arith.truncf %8 : vector<128x128xf32> to vector<128x128xbf16>
    %c0_6 = arith.constant 0 : index
    %c0_7 = arith.constant 0 : index
    %10 = vector.load %arg4[%c0_6, %c0_7] : memref<128x256xbf16, #tpu.memory_space<vmem>>, vector<128x256xbf16>
    %cst_8 = arith.constant dense<0.000000e+00> : vector<128x256xf32>
    %11 = tpu.matmul %9, %10, %cst_8 {dimension_numbers = #tpu.dot_dimension_numbers<[1], [0], [0], [1], [0, 0, 1, 1], [], []>} : vector<128x128xbf16>, vector<128x256xbf16>, vector<128x256xf32> -> vector<128x256xf32>
    %c0_9 = arith.constant 0 : index
    %c0_10 = arith.constant 0 : index
    %12 = vector.load %arg5[%c0_9, %c0_10] : memref<1x256xf32, #tpu.memory_space<vmem>>, vector<1x256xf32>
    %13 = vector.broadcast %12 : vector<1x256xf32> to vector<128x256xf32>
    %14 = arith.addf %11, %13 : vector<128x256xf32>
    %cst_11 = arith.constant 0.000000e+00 : f32
    %15 = vector.broadcast %cst_11 : f32 to vector<128x256xf32>
    %16 = arith.maximumf %14, %15 : vector<128x256xf32>
    %17 = arith.truncf %16 : vector<128x256xf32> to vector<128x256xbf16>
    %c0_12 = arith.constant 0 : index
    %c0_13 = arith.constant 0 : index
    %18 = vector.load %arg6[%c0_12, %c0_13] : memref<256x64xbf16, #tpu.memory_space<vmem>>, vector<256x64xbf16>
    %cst_14 = arith.constant dense<0.000000e+00> : vector<128x64xf32>
    %19 = tpu.matmul %17, %18, %cst_14 {dimension_numbers = #tpu.dot_dimension_numbers<[1], [0], [0], [1], [0, 0, 1, 1], [], []>} : vector<128x256xbf16>, vector<256x64xbf16>, vector<128x64xf32> -> vector<128x64xf32>
    %c0_15 = arith.constant 0 : index
    %c0_16 = arith.constant 0 : index
    %20 = vector.load %arg7[%c0_15, %c0_16] : memref<1x64xf32, #tpu.memory_space<vmem>>, vector<1x64xf32>
    %21 = vector.broadcast %20 : vector<1x64xf32> to vector<128x64xf32>
    %22 = arith.addf %19, %21 : vector<128x64xf32>
    %cst_17 = arith.constant 0.000000e+00 : f32
    %23 = vector.broadcast %cst_17 : f32 to vector<128x64xf32>
    %24 = arith.maximumf %22, %23 : vector<128x64xf32>
    %c0_18 = arith.constant 0 : index
    %c0_19 = arith.constant 0 : index
    %25 = vector.load %arg8[%c0_18, %c0_19] : memref<8x64xbf16, #tpu.memory_space<vmem>>, vector<8x64xbf16>
    %26 = arith.truncf %24 : vector<128x64xf32> to vector<128x64xbf16>
    "tpu.trace_start"() <{level = 10 : i32, message = "od,td->ot"}> : () -> ()
    %cst_20 = arith.constant dense<0.000000e+00> : vector<8x128xf32>
    %27 = tpu.matmul %25, %26, %cst_20 {dimension_numbers = #tpu.dot_dimension_numbers<[1], [1], [0], [0], [0, 0, 1, 0], [], []>} : vector<8x64xbf16>, vector<128x64xbf16>, vector<8x128xf32> -> vector<8x128xf32>
    "tpu.trace_stop"() : () -> ()
    %28 = vector.extract_strided_slice %27 {offsets = [0, 0], sizes = [1, 128], strides = [1, 1]} : vector<8x128xf32> to vector<1x128xf32>
    %c0_21 = arith.constant 0 : index
    %c0_22 = arith.constant 0 : index
    %29 = vector.load %arg9[%c0_21, %c0_22] : memref<1x1xf32, #tpu.memory_space<vmem>>, vector<1x1xf32>
    %30 = vector.broadcast %29 : vector<1x1xf32> to vector<1x128xf32>
    %31 = arith.addf %28, %30 : vector<1x128xf32>
    %c0_23 = arith.constant 0 : index
    %c0_24 = arith.constant 0 : index
    %c0_25 = arith.constant 0 : index
    %32 = vector.load %arg10[%c0_23, %c0_24, %c0_25] : memref<1x1x128xf32, #tpu.memory_space<vmem>>, vector<1x1x128xf32>
    %33 = vector.shape_cast %32 : vector<1x1x128xf32> to vector<1x128xf32>
    %34 = vector.shape_cast %31 : vector<1x128xf32> to vector<1x1x128xf32>
    tpu.vector_store %arg10[%c0_23, %c0_24, %c0_25], %34 {strides = array<i32>} : memref<1x1x128xf32, #tpu.memory_space<vmem>>, vector<1x1x128xf32>,
    return
  }
  func.func @transform_0(%arg0: i32) -> (i32, i32) {
    %c0_i32 = arith.constant 0 : i32
    %c0_i32_0 = arith.constant 0 : i32
    return %arg0, %c0_i32 : i32, i32
  }
  func.func @transform_1(%arg0: i32) -> (i32, i32) {
    %c0_i32 = arith.constant 0 : i32
    %c0_i32_0 = arith.constant 0 : i32
    %c0_i32_1 = arith.constant 0 : i32
    return %c0_i32, %c0_i32_0 : i32, i32
  }
  func.func @transform_2(%arg0: i32) -> (i32, i32) {
    %c0_i32 = arith.constant 0 : i32
    %c0_i32_0 = arith.constant 0 : i32
    %c0_i32_1 = arith.constant 0 : i32
    return %c0_i32, %c0_i32_0 : i32, i32
  }
  func.func @transform_3(%arg0: i32) -> (i32, i32) {
    %c0_i32 = arith.constant 0 : i32
    %c0_i32_0 = arith.constant 0 : i32
    %c0_i32_1 = arith.constant 0 : i32
    return %c0_i32, %c0_i32_0 : i32, i32
  }
  func.func @transform_4(%arg0: i32) -> (i32, i32) {
    %c0_i32 = arith.constant 0 : i32
    %c0_i32_0 = arith.constant 0 : i32
    %c0_i32_1 = arith.constant 0 : i32
    return %c0_i32, %c0_i32_0 : i32, i32
  }
  func.func @transform_5(%arg0: i32) -> (i32, i32) {
    %c0_i32 = arith.constant 0 : i32
    %c0_i32_0 = arith.constant 0 : i32
    %c0_i32_1 = arith.constant 0 : i32
    return %c0_i32, %c0_i32_0 : i32, i32
  }
  func.func @transform_6(%arg0: i32) -> (i32, i32) {
    %c0_i32 = arith.constant 0 : i32
    %c0_i32_0 = arith.constant 0 : i32
    %c0_i32_1 = arith.constant 0 : i32
    return %c0_i32, %c0_i32_0 : i32, i32
  }
  func.func @transform_7(%arg0: i32) -> (i32, i32) {
    %c0_i32 = arith.constant 0 : i32
    %c0_i32_0 = arith.constant 0 : i32
    %c0_i32_1 = arith.constant 0 : i32
    return %c0_i32, %c0_i32_0 : i32, i32
  }
  func.func @transform_8(%arg0: i32) -> (i32, i32) {
    %c0_i32 = arith.constant 0 : i32
    %c0_i32_0 = arith.constant 0 : i32
    %c0_i32_1 = arith.constant 0 : i32
    return %c0_i32, %c0_i32_0 : i32, i32
  }
  func.func @transform_9(%arg0: i32) -> (i32, i32, i32) {
    %c0_i32 = arith.constant 0 : i32
    %c0_i32_0 = arith.constant 0 : i32
    %c0_i32_1 = arith.constant 0 : i32
    return %arg0, %c0_i32, %c0_i32_0 : i32, i32, i32
  }
}

</mosaic_0001>

<llo_original>
// kernel: tpu_custom_call.1
$region0: #{tpu_custom_call.1}
  #allocation0 [shape = 'u32[]', space=smem, size = 0x4, offset = 0x4, fixed_abs, tag = 'smem constant byte address 0x4 - core index']
  #allocation1 [shape = 'u32[144,128]{1,0:T(1,128)}', space=vmem, size = 0x12000, scoped, tag = 'internal scratch']
  #allocation2 [shape = 'f32[1,1]{1,0:T(1,128)S(1)}', space=vmem, size = 0x200, scoped, tag = 'scoped memory for tpu_custom_call.1']
  %s0 = inlined_call_operand.vmem [shape: f32[256,64], index: 0, kind: input, shape index: {}]
  %s1 = inlined_call_operand.vmem [shape: bf16[64,128], index: 1, kind: input, shape index: {}]
  %s2 = inlined_call_operand.vmem [shape: f32[1,128], index: 2, kind: input, shape index: {}]
  %s3 = inlined_call_operand.vmem [shape: bf16[128,256], index: 3, kind: input, shape index: {}]
  %s4 = inlined_call_operand.vmem [shape: f32[1,256], index: 4, kind: input, shape index: {}]
  %s5 = inlined_call_operand.vmem [shape: bf16[256,64], index: 5, kind: input, shape index: {}]
  %s6 = inlined_call_operand.vmem [shape: f32[1,64], index: 6, kind: input, shape index: {}]
  %s7 = inlined_call_operand.vmem [shape: bf16[8,64], index: 7, kind: input, shape index: {}]
  %s8 = inlined_call_operand.<no memory space> [shape: f32[1,1], index: 8, kind: input, shape index: {}]
  %s9 = inlined_call_operand.hbm [shape: f32[2,1,128], index: 9, kind: output, shape index: {}]
  %s10 = sld [smem:[#allocation0]]
  $region69: #{tpu_custom_call.1} parent=0
    _
  %s12 = ssub.s32 1, %s10
  %s13 = scalar_select 0, %s12, %s10
  %v14 = vstv %s8
  %15 = vst [vmem:[#allocation2] sm:$0x1] %v14
  $region1: #{tpu_custom_call.1} parent=0
    #allocation3 [shape = 'u8[1024]{0}', space=vmem, size = 0x400, scoped, tag = 'output window, operand 0']
    #allocation4 [shape = 's32[2]{0}', space=sflag, size = 0x8, scoped, tag = 'scoped memory for tpu_custom_call.1']
    %16 = vsyncpa [#allocation4], 0
    %s17 = scalar_lea.sflag [#allocation4], 1
    %18 = vsyncpa %s17, 0
    loop: start=0, step=1, limit=4
    $region2: #{tpu_custom_call.1} parent=1 // loop_pre_header
      _
    $region3: #{tpu_custom_call.1} parent=1 // loop_header
      %s20 = sphi 0, %s24
      %p21 = scmp.ge.s32.totalorder %s20, 4
      %s30 = sphi 0, %s32
      %s33 = sphi 0, %s30
      %s34 = sphi 0, %s33
      %s50 = sphi 0, %s34
      %s54 = sphi 0, %s54
      %s56 = sphi 0, %s54
      %s57 = sphi 0, %s56
      %s71 = sphi 0, %s57
      %s75 = sphi 0, %s75
      %s77 = sphi 0, %s75
      %s78 = sphi 0, %s77
      %s92 = sphi 0, %s78
      %s96 = sphi 0, %s96
      %s98 = sphi 0, %s96
      %s99 = sphi 0, %s98
      %s113 = sphi 0, %s99
      %s117 = sphi 0, %s117
      %s119 = sphi 0, %s117
      %s120 = sphi 0, %s119
      %s134 = sphi 0, %s120
      %s138 = sphi 0, %s138
      %s140 = sphi 0, %s138
      %s141 = sphi 0, %s140
      %s155 = sphi 0, %s141
      %s159 = sphi 0, %s159
      %s161 = sphi 0, %s159
      %s162 = sphi 0, %s161
      %s176 = sphi 0, %s162
      %s180 = sphi 0, %s180
      %s182 = sphi 0, %s180
      %s183 = sphi 0, %s182
      %s197 = sphi 0, %s183
      %s201 = sphi 0, %s201
      %s203 = sphi 0, %s201
      %s204 = sphi 0, %s203
      %s218 = sphi 0, %s204
      %s224 = sphi 0, %s226
      %s227 = sphi 0, %s224
      %s228 = sphi 0, %s227
      %s244 = sphi 0, %s228
    $region4: #{tpu_custom_call.1} parent=1 // loop_header_branch
      %23 = sbr.rel (%p21) target = $region8
    $region5: #{tpu_custom_call.1} parent=1 // loop_body
      %s25 = ssub.s32 %s20, 1
      %s26 = ssub.s32 %s20, 2
      %s27 = sadd.s32 %s20, 1
      %s28 = ssub.s32 %s20, %s27
      %p29 = scmp.eq.s32.totalorder %s28, 0
      %s31 = sadd.s32 %s30, 1
      %s32 = scalar_select %p29, %s30, %s31
      %p35 = pneg %p29
      %p36 = scmp.eq.s32.totalorder %s20, 1
      %p37 = por %p35, %p36
      %p38 = scmp.ne.s32.totalorder %s30, %s33
      %p39 = scmp.eq.s32.totalorder %s20, 0
      %p40 = por %p38, %p39
      %p41 = scmp.ne.s32.totalorder %s30, %s33
      %p42 = scmp.eq.s32.totalorder %s25, 1
      %p43 = por %p41, %p42
      %p44 = scmp.ne.s32.totalorder %s33, %s34
      %p45 = scmp.eq.s32.totalorder %s25, 0
      %p46 = por %p44, %p45
      %p47 = scmp.ne.s32.totalorder %s33, %s34
      %p48 = scmp.eq.s32.totalorder %s26, 1
      %p49 = por %p47, %p48
      %p51 = scmp.ne.s32.totalorder %s34, %s50
      %p52 = scmp.eq.s32.totalorder %s26, 0
      %p53 = por %p51, %p52
      %s55 = sadd.s32 %s54, 1
      %p58 = scmp.eq.s32.totalorder %s20, 1
      %p59 = scmp.ne.s32.totalorder %s54, %s56
      %p60 = scmp.eq.s32.totalorder %s20, 0
      %p61 = por %p59, %p60
      %p62 = scmp.ne.s32.totalorder %s54, %s56
      %p63 = scmp.eq.s32.totalorder %s25, 1
      %p64 = por %p62, %p63
      %p65 = scmp.ne.s32.totalorder %s56, %s57
      %p66 = scmp.eq.s32.totalorder %s25, 0
      %p67 = por %p65, %p66
      %p68 = scmp.ne.s32.totalorder %s56, %s57
      %p69 = scmp.eq.s32.totalorder %s26, 1
      %p70 = por %p68, %p69
      %p72 = scmp.ne.s32.totalorder %s57, %s71
      %p73 = scmp.eq.s32.totalorder %s26, 0
      %p74 = por %p72, %p73
      %s76 = sadd.s32 %s75, 1
      %p79 = scmp.eq.s32.totalorder %s20, 1
      %p80 = scmp.ne.s32.totalorder %s75, %s77
      %p81 = scmp.eq.s32.totalorder %s20, 0
      %p82 = por %p80, %p81
      %p83 = scmp.ne.s32.totalorder %s75, %s77
      %p84 = scmp.eq.s32.totalorder %s25, 1
      %p85 = por %p83, %p84
      %p86 = scmp.ne.s32.totalorder %s77, %s78
      %p87 = scmp.eq.s32.totalorder %s25, 0
      %p88 = por %p86, %p87
      %p89 = scmp.ne.s32.totalorder %s77, %s78
      %p90 = scmp.eq.s32.totalorder %s26, 1
      %p91 = por %p89, %p90
      %p93 = scmp.ne.s32.totalorder %s78, %s92
      %p94 = scmp.eq.s32.totalorder %s26, 0
      %p95 = por %p93, %p94
      %s97 = sadd.s32 %s96, 1
      %p100 = scmp.eq.s32.totalorder %s20, 1
      %p101 = scmp.ne.s32.totalorder %s96, %s98
      %p102 = scmp.eq.s32.totalorder %s20, 0
      %p103 = por %p101, %p102
      %p104 = scmp.ne.s32.totalorder %s96, %s98
      %p105 = scmp.eq.s32.totalorder %s25, 1
      %p106 = por %p104, %p105
      %p107 = scmp.ne.s32.totalorder %s98, %s99
      %p108 = scmp.eq.s32.totalorder %s25, 0
      %p109 = por %p107, %p108
      %p110 = scmp.ne.s32.totalorder %s98, %s99
      %p111 = scmp.eq.s32.totalorder %s26, 1
      %p112 = por %p110, %p111
      %p114 = scmp.ne.s32.totalorder %s99, %s113
      %p115 = scmp.eq.s32.totalorder %s26, 0
      %p116 = por %p114, %p115
      %s118 = sadd.s32 %s117, 1
      %p121 = scmp.eq.s32.totalorder %s20, 1
      %p122 = scmp.ne.s32.totalorder %s117, %s119
      %p123 = scmp.eq.s32.totalorder %s20, 0
      %p124 = por %p122, %p123
      %p125 = scmp.ne.s32.totalorder %s117, %s119
      %p126 = scmp.eq.s32.totalorder %s25, 1
      %p127 = por %p125, %p126
      %p128 = scmp.ne.s32.totalorder %s119, %s120
      %p129 = scmp.eq.s32.totalorder %s25, 0
      %p130 = por %p128, %p129
      %p131 = scmp.ne.s32.totalorder %s119, %s120
      %p132 = scmp.eq.s32.totalorder %s26, 1
      %p133 = por %p131, %p132
      %p135 = scmp.ne.s32.totalorder %s120, %s134
      %p136 = scmp.eq.s32.totalorder %s26, 0
      %p137 = por %p135, %p136
      %s139 = sadd.s32 %s138, 1
      %p142 = scmp.eq.s32.totalorder %s20, 1
      %p143 = scmp.ne.s32.totalorder %s138, %s140
      %p144 = scmp.eq.s32.totalorder %s20, 0
      %p145 = por %p143, %p144
      %p146 = scmp.ne.s32.totalorder %s138, %s140
      %p147 = scmp.eq.s32.totalorder %s25, 1
      %p148 = por %p146, %p147
      %p149 = scmp.ne.s32.totalorder %s140, %s141
      %p150 = scmp.eq.s32.totalorder %s25, 0
      %p151 = por %p149, %p150
      %p152 = scmp.ne.s32.totalorder %s140, %s141
      %p153 = scmp.eq.s32.totalorder %s26, 1
      %p154 = por %p152, %p153
      %p156 = scmp.ne.s32.totalorder %s141, %s155
      %p157 = scmp.eq.s32.totalorder %s26, 0
      %p158 = por %p156, %p157
      %s160 = sadd.s32 %s159, 1
      %p163 = scmp.eq.s32.totalorder %s20, 1
      %p164 = scmp.ne.s32.totalorder %s159, %s161
      %p165 = scmp.eq.s32.totalorder %s20, 0
      %p166 = por %p164, %p165
      %p167 = scmp.ne.s32.totalorder %s159, %s161
      %p168 = scmp.eq.s32.totalorder %s25, 1
      %p169 = por %p167, %p168
      %p170 = scmp.ne.s32.totalorder %s161, %s162
      %p171 = scmp.eq.s32.totalorder %s25, 0
      %p172 = por %p170, %p171
      %p173 = scmp.ne.s32.totalorder %s161, %s162
      %p174 = scmp.eq.s32.totalorder %s26, 1
      %p175 = por %p173, %p174
      %p177 = scmp.ne.s32.totalorder %s162, %s176
      %p178 = scmp.eq.s32.totalorder %s26, 0
      %p179 = por %p177, %p178
      %s181 = sadd.s32 %s180, 1
      %p184 = scmp.eq.s32.totalorder %s20, 1
      %p185 = scmp.ne.s32.totalorder %s180, %s182
      %p186 = scmp.eq.s32.totalorder %s20, 0
      %p187 = por %p185, %p186
      %p188 = scmp.ne.s32.totalorder %s180, %s182
      %p189 = scmp.eq.s32.totalorder %s25, 1
      %p190 = por %p188, %p189
      %p191 = scmp.ne.s32.totalorder %s182, %s183
      %p192 = scmp.eq.s32.totalorder %s25, 0
      %p193 = por %p191, %p192
      %p194 = scmp.ne.s32.totalorder %s182, %s183
      %p195 = scmp.eq.s32.totalorder %s26, 1
      %p196 = por %p194, %p195
      %p198 = scmp.ne.s32.totalorder %s183, %s197
      %p199 = scmp.eq.s32.totalorder %s26, 0
      %p200 = por %p198, %p199
      %s202 = sadd.s32 %s201, 1
      %p205 = scmp.eq.s32.totalorder %s20, 1
      %p206 = scmp.ne.s32.totalorder %s201, %s203
      %p207 = scmp.eq.s32.totalorder %s20, 0
      %p208 = por %p206, %p207
      %p209 = scmp.ne.s32.totalorder %s201, %s203
      %p210 = scmp.eq.s32.totalorder %s25, 1
      %p211 = por %p209, %p210
      %p212 = scmp.ne.s32.totalorder %s203, %s204
      %p213 = scmp.eq.s32.totalorder %s25, 0
      %p214 = por %p212, %p213
      %p215 = scmp.ne.s32.totalorder %s203, %s204
      %p216 = scmp.eq.s32.totalorder %s26, 1
      %p217 = por %p215, %p216
      %p219 = scmp.ne.s32.totalorder %s204, %s218
      %p220 = scmp.eq.s32.totalorder %s26, 0
      %p221 = por %p219, %p220
      %s222 = ssub.s32 %s20, %s27
      %p223 = scmp.eq.s32.totalorder %s222, 0
      %s225 = sadd.s32 %s224, 1
      %s226 = scalar_select %p223, %s224, %s225
      %p229 = pneg %p223
      %p230 = scmp.eq.s32.totalorder %s20, 1
      %p231 = por %p229, %p230
      %p232 = scmp.ne.s32.totalorder %s224, %s227
      %p233 = scmp.eq.s32.totalorder %s20, 0
      %p234 = por %p232, %p233
      %p235 = scmp.ne.s32.totalorder %s224, %s227
      %p236 = scmp.eq.s32.totalorder %s25, 1
      %p237 = por %p235, %p236
      %p238 = scmp.ne.s32.totalorder %s227, %s228
      %p239 = scmp.eq.s32.totalorder %s25, 0
      %p240 = por %p238, %p239
      %p241 = scmp.ne.s32.totalorder %s227, %s228
      %p242 = scmp.eq.s32.totalorder %s26, 1
      %p243 = por %p241, %p242
      %p245 = scmp.ne.s32.totalorder %s228, %s244
      %p246 = scmp.eq.s32.totalorder %s26, 0
      %p247 = por %p245, %p246
      %p248 = scmp.le.s32.totalorder 1, %s20
      %p249 = scmp.lt.s32.totalorder %s20, 3
      %p250 = pnand %p248, %p249
      %p251 = pneg %p250
      // Predicated region
      $region9: #{tpu_custom_call.1} parent=5 // pred_check
        _
      $region10: #{tpu_custom_call.1} parent=5 // pred_check_branch
        %253 = sbr.rel (%p250) target = $region12
      $region11: #{tpu_custom_call.1} parent=5 // pred_region
        %s254 = ssub.s32 %s20, 1
        // Predicated region
        $region13: #{tpu_custom_call.1} parent=11 // pred_check
          %p255 = pneg %p67
        $region14: #{tpu_custom_call.1} parent=11 // pred_check_branch
          %257 = sbr.rel (%p255) target = $region16
        $region15: #{tpu_custom_call.1} parent=11 // pred_region
          _
        $region16: #{tpu_custom_call.1} parent=11 // pred_fallthru
          _
        // Predicated region
        $region17: #{tpu_custom_call.1} parent=11 // pred_check
          %p258 = pneg %p88
        $region18: #{tpu_custom_call.1} parent=11 // pred_check_branch
          %260 = sbr.rel (%p258) target = $region20
        $region19: #{tpu_custom_call.1} parent=11 // pred_region
          _
        $region20: #{tpu_custom_call.1} parent=11 // pred_fallthru
          _
        // Predicated region
        $region21: #{tpu_custom_call.1} parent=11 // pred_check
          %p261 = pneg %p109
        $region22: #{tpu_custom_call.1} parent=11 // pred_check_branch
          %263 = sbr.rel (%p261) target = $region24
        $region23: #{tpu_custom_call.1} parent=11 // pred_region
          _
        $region24: #{tpu_custom_call.1} parent=11 // pred_fallthru
          _
        // Predicated region
        $region25: #{tpu_custom_call.1} parent=11 // pred_check
          %p264 = pneg %p130
        $region26: #{tpu_custom_call.1} parent=11 // pred_check_branch
          %266 = sbr.rel (%p264) target = $region28
        $region27: #{tpu_custom_call.1} parent=11 // pred_region
          _
        $region28: #{tpu_custom_call.1} parent=11 // pred_fallthru
          _
        // Predicated region
        $region29: #{tpu_custom_call.1} parent=11 // pred_check
          %p267 = pneg %p151
        $region30: #{tpu_custom_call.1} parent=11 // pred_check_branch
          %269 = sbr.rel (%p267) target = $region32
        $region31: #{tpu_custom_call.1} parent=11 // pred_region
          _
        $region32: #{tpu_custom_call.1} parent=11 // pred_fallthru
          _
        // Predicated region
        $region33: #{tpu_custom_call.1} parent=11 // pred_check
          %p270 = pneg %p172
        $region34: #{tpu_custom_call.1} parent=11 // pred_check_branch
          %272 = sbr.rel (%p270) target = $region36
        $region35: #{tpu_custom_call.1} parent=11 // pred_region
          _
        $region36: #{tpu_custom_call.1} parent=11 // pred_fallthru
          _
        // Predicated region
        $region37: #{tpu_custom_call.1} parent=11 // pred_check
          %p273 = pneg %p193
        $region38: #{tpu_custom_call.1} parent=11 // pred_check_branch
          %275 = sbr.rel (%p273) target = $region40
        $region39: #{tpu_custom_call.1} parent=11 // pred_region
          _
        $region40: #{tpu_custom_call.1} parent=11 // pred_fallthru
          _
        // Predicated region
        $region41: #{tpu_custom_call.1} parent=11 // pred_check
          %p276 = pneg %p214
        $region42: #{tpu_custom_call.1} parent=11 // pred_check_branch
          %278 = sbr.rel (%p276) target = $region44
        $region43: #{tpu_custom_call.1} parent=11 // pred_region
          _
        $region44: #{tpu_custom_call.1} parent=11 // pred_fallthru
          _
      $region12: #{tpu_custom_call.1} parent=5 // pred_fallthru
        _
      %p279 = scmp.lt.s32.totalorder %s20, 2
      // Predicated region
      $region45: #{tpu_custom_call.1} parent=5 // pred_check
        %p280 = pneg %p279
      $region46: #{tpu_custom_call.1} parent=5 // pred_check_branch
        %282 = sbr.rel (%p280) target = $region48
      $region47: #{tpu_custom_call.1} parent=5 // pred_region
        // Predicated region
        $region49: #{tpu_custom_call.1} parent=47 // pred_check
          %p283 = pneg %p40
        $region50: #{tpu_custom_call.1} parent=47 // pred_check_branch
          %285 = sbr.rel (%p283) target = $region52
        $region51: #{tpu_custom_call.1} parent=47 // pred_region
          %s286 = smul.u32 16, %s20
          %p287 = scmp.lt.s32.totalorder %s286, 31
          %s288 = scalar_select %p287, %s286, 31
          %s289 = smul.addr %s288, 8
          %s290 = scalar_lea.vmem %s0, %s289
          %s291 = smul.u32 16, %s20
        $region52: #{tpu_custom_call.1} parent=47 // pred_fallthru
          _
      $region48: #{tpu_custom_call.1} parent=5 // pred_fallthru
        _
      %p292 = scmp.le.s32.totalorder 1, %s20
      %p293 = scmp.lt.s32.totalorder %s20, 3
      %p294 = pnand %p292, %p293
      %p295 = pneg %p294
      // Predicated region
      $region53: #{tpu_custom_call.1} parent=5 // pred_check
        _
      $region54: #{tpu_custom_call.1} parent=5 // pred_check_branch
        %297 = sbr.rel (%p294) target = $region56
      $region55: #{tpu_custom_call.1} parent=5 // pred_region
        %s298 = ssub.s32 %s20, 1
        %s299 = smul.u32 16, %s25
        %p300 = scmp.lt.s32.totalorder %s299, 31
        %s301 = scalar_select %p300, %s299, 31
        %s302 = smul.addr %s301, 8
        %s303 = scalar_lea.vmem %s0, %s302
        %p304 = pneg %p46
        %p305 = pneg %p43
        %p306 = pneg %p67
        %p307 = pneg %p64
        %p308 = pneg %p88
        %p309 = pneg %p85
        %p310 = pneg %p109
        %p311 = pneg %p106
        %p312 = pneg %p130
        %p313 = pneg %p127
        %p314 = pneg %p151
        %p315 = pneg %p148
        %p316 = pneg %p172
        %p317 = pneg %p169
        %p318 = pneg %p193
        %p319 = pneg %p190
        %p320 = pneg %p214
        %p321 = pneg %p211
        %p322 = pneg %p240
        %p323 = pneg %p237
        %s324 = sand.u32 %s227, 1
        %s325 = scalar_lea.sflag [#allocation4], %s324
        %s326 = sand.u32 %s227, 1
        %s327 = scalar_lea.vmem [#allocation3], %s326
        %s328 = smul.u32 16, %s25
        %p329 = scmp.lt.s32.totalorder %s328, 31
        %s330 = scalar_select %p329, %s328, 31
        %s331 = smul.addr %s330, 8
        %s332 = scalar_lea.vmem %s0, %s331
        %s333 = smul.u32 16, %s25
        %v335 = vld [vmem:[%s332] sm:$0xff]
        %v336 = vld [vmem:[%s332 + $0x8] sm:$0xff]
        %v337 = vld [vmem:[%s332 + $0x10] sm:$0xff]
        %v338 = vld [vmem:[%s332 + $0x18] sm:$0xff]
        %v339 = vld [vmem:[%s332 + $0x20] sm:$0xff]
        %v340 = vld [vmem:[%s332 + $0x28] sm:$0xff]
        %v341 = vld [vmem:[%s332 + $0x30] sm:$0xff]
        %v342 = vld [vmem:[%s332 + $0x38] sm:$0xff]
        %v343 = vld [vmem:[%s332 + $0x40] sm:$0xff]
        %v344 = vld [vmem:[%s332 + $0x48] sm:$0xff]
        %v345 = vld [vmem:[%s332 + $0x50] sm:$0xff]
        %v346 = vld [vmem:[%s332 + $0x58] sm:$0xff]
        %v347 = vld [vmem:[%s332 + $0x60] sm:$0xff]
        %v348 = vld [vmem:[%s332 + $0x68] sm:$0xff]
        %v349 = vld [vmem:[%s332 + $0x70] sm:$0xff]
        %v350 = vld [vmem:[%s332 + $0x78] sm:$0xff]
        %v351 = vpack.c.bf16 %v336, %v335
        %v352 = vpack.c.bf16 %v338, %v337
        %v353 = vpack.c.bf16 %v340, %v339
        %v354 = vpack.c.bf16 %v342, %v341
        %v355 = vpack.c.bf16 %v344, %v343
        %v356 = vpack.c.bf16 %v346, %v345
        %v357 = vpack.c.bf16 %v348, %v347
        %v358 = vpack.c.bf16 %v350, %v349
        %v359 = vld [vmem:[%s1] sm:$0xf]
        %v360 = vld [vmem:[%s1 + $0x4] sm:$0xf]
        %v361 = vld [vmem:[%s1 + $0x8] sm:$0xf]
        %v362 = vld [vmem:[%s1 + $0xc] sm:$0xf]
        %v363 = vld [vmem:[%s1 + $0x10] sm:$0xf]
        %v364 = vld [vmem:[%s1 + $0x14] sm:$0xf]
        %v365 = vld [vmem:[%s1 + $0x18] sm:$0xf]
        %v366 = vld [vmem:[%s1 + $0x1c] sm:$0xf]
        %v367 = vld [vmem:[%s2] sm:$0x1]
        %v369 = vlaneseq
        %v370 = vshrl.u32 %v369, 7
        %v371 = vsub.s32 0, %v370
        %v372 = vrot.slane %v367, %v371
        %v382 = vunpack.c.l.b16 %v359
        %v383 = vunpack.c.l.b16 %v360
        %v384 = vunpack.c.l.b16 %v361
        %v385 = vunpack.c.l.b16 %v362
        %v386 = vunpack.c.l.b16 %v363
        %v387 = vunpack.c.l.b16 %v364
        %v388 = vunpack.c.l.b16 %v365
        %v389 = vunpack.c.l.b16 %v366
        %v390 = vpack.c.b16 %v383, %v382
        %v391 = vpack.c.b16 %v385, %v384
        %v392 = vpack.c.b16 %v387, %v386
        %v393 = vpack.c.b16 %v389, %v388
        %vm398 = vcmask 523264
        %v400 = vsel %vm398, %v351, 0
        %v403 = vsel %vm398, %v352, 0
        %v406 = vsel %vm398, %v353, 0
        %v409 = vsel %vm398, %v354, 0
        %v412 = vsel %vm398, %v355, 0
        %v415 = vsel %vm398, %v356, 0
        %v418 = vsel %vm398, %v357, 0
        %v421 = vsel %vm398, %v358, 0
        %423 = vmatprep.subr.bf16.mxu0 0
        %424 = vmatpush1.bf16.msra.mxu0 %v390
        %425 = vmatprep.subr.bf16.mxu0 0
        %426 = vmatpush1.bf16.msra.mxu0 %v391
        %427 = vmatprep.subr.bf16.mxu0 0
        %428 = vmatpush1.bf16.msra.mxu0 %v392
        %429 = vmatprep.subr.bf16.mxu0 0
        %430 = vmatpush1.bf16.msra.mxu0 %v393
        %431 = vmatprep.subr.bf16.mxu0 0
        %432 = vmatpush1.bf16.msra.mxu0 0
        %433 = vmatprep.subr.bf16.mxu0 0
        %434 = vmatpush1.bf16.msra.mxu0 0
        %435 = vmatprep.subr.bf16.mxu0 0
        %436 = vmatpush1.bf16.msra.mxu0 0
        %437 = vmatprep.subr.bf16.mxu0 0
        %438 = vmatpush1.bf16.msra.mxu0 0
        %439 = vmatprep.subr.bf16.mxu0 0
        %440 = vmatpush1.bf16.msra.mxu0 0
        %441 = vmatprep.subr.bf16.mxu0 0
        %442 = vmatpush1.bf16.msra.mxu0 0
        %443 = vmatprep.subr.bf16.mxu0 0
        %444 = vmatpush1.bf16.msra.mxu0 0
        %445 = vmatprep.subr.bf16.mxu0 0
        %446 = vmatpush1.bf16.msra.mxu0 0
        %447 = vmatprep.subr.bf16.mxu0 0
        %448 = vmatpush1.bf16.msra.mxu0 0
        %449 = vmatprep.subr.bf16.mxu0 0
        %450 = vmatpush1.bf16.msra.mxu0 0
        %451 = vmatprep.subr.bf16.mxu0 0
        %452 = vmatpush1.bf16.msra.mxu0 0
        %453 = vmatprep.subr.bf16.mxu0 0
        %454 = vmatpush1.bf16.msra.mxu0 0
        %455 = vmatprep.mubr.bf16.mxu0 0
        %456 = vmatmul.mubr.bf16.gmra.mrb[0].mxu0 %v400
        %v457 = vpop.f32.mrb[0].mxu0
        %v458 = vadd.f32 %v372, %v457
        %v459 = vpop.f32.mrb[0].mxu0
        %v460 = vpop.f32.mrb[0].mxu0
        %v461 = vadd.f32 %v372, %v460
        %v462 = vpop.f32.mrb[0].mxu0
        %463 = vmatprep.mubr.bf16.mxu0 0
        %464 = vmatmul.mubr.bf16.gmra.mrb[0].mxu0 %v403
        %v465 = vpop.f32.mrb[0].mxu0
        %v466 = vadd.f32 %v372, %v465
        %v467 = vpop.f32.mrb[0].mxu0
        %v468 = vpop.f32.mrb[0].mxu0
        %v469 = vadd.f32 %v372, %v468
        %v470 = vpop.f32.mrb[0].mxu0
        %471 = vmatprep.mubr.bf16.mxu0 0
        %472 = vmatmul.mubr.bf16.gmra.mrb[0].mxu0 %v406
        %v473 = vpop.f32.mrb[0].mxu0
        %v474 = vadd.f32 %v372, %v473
        %v475 = vpop.f32.mrb[0].mxu0
        %v476 = vpop.f32.mrb[0].mxu0
        %v477 = vadd.f32 %v372, %v476
        %v478 = vpop.f32.mrb[0].mxu0
        %479 = vmatprep.mubr.bf16.mxu0 0
        %480 = vmatmul.mubr.bf16.gmra.mrb[0].mxu0 %v409
        %v481 = vpop.f32.mrb[0].mxu0
        %v482 = vadd.f32 %v372, %v481
        %v483 = vpop.f32.mrb[0].mxu0
        %v484 = vpop.f32.mrb[0].mxu0
        %v485 = vadd.f32 %v372, %v484
        %v486 = vpop.f32.mrb[0].mxu0
        %487 = vmatprep.mubr.bf16.mxu0 0
        %488 = vmatmul.mubr.bf16.gmra.mrb[0].mxu0 %v412
        %v489 = vpop.f32.mrb[0].mxu0
        %v490 = vadd.f32 %v372, %v489
        %v491 = vpop.f32.mrb[0].mxu0
        %v492 = vpop.f32.mrb[0].mxu0
        %v493 = vadd.f32 %v372, %v492
        %v494 = vpop.f32.mrb[0].mxu0
        %495 = vmatprep.mubr.bf16.mxu0 0
        %496 = vmatmul.mubr.bf16.gmra.mrb[0].mxu0 %v415
        %v497 = vpop.f32.mrb[0].mxu0
        %v498 = vadd.f32 %v372, %v497
        %v499 = vpop.f32.mrb[0].mxu0
        %v500 = vpop.f32.mrb[0].mxu0
        %v501 = vadd.f32 %v372, %v500
        %v502 = vpop.f32.mrb[0].mxu0
        %503 = vmatprep.mubr.bf16.mxu0 0
        %504 = vmatmul.mubr.bf16.gmra.mrb[0].mxu0 %v418
        %v505 = vpop.f32.mrb[0].mxu0
        %v506 = vadd.f32 %v372, %v505
        %v507 = vpop.f32.mrb[0].mxu0
        %v508 = vpop.f32.mrb[0].mxu0
        %v509 = vadd.f32 %v372, %v508
        %v510 = vpop.f32.mrb[0].mxu0
        %511 = vmatprep.mubr.bf16.mxu0 0
        %512 = vmatmul.mubr.bf16.gmra.mrb[0].mxu0 %v421
        %v513 = vpop.f32.mrb[0].mxu0
        %v514 = vadd.f32 %v372, %v513
        %v515 = vpop.f32.mrb[0].mxu0
        %v516 = vpop.f32.mrb[0].mxu0
        %v517 = vadd.f32 %v372, %v516
        %v518 = vpop.f32.mrb[0].mxu0
        %519 = vdwg.mxu0
        %v520 = vmax.f32 %v458, 0.0
        %v521 = vmax.f32 %v461, 0.0
        %v522 = vmax.f32 %v466, 0.0
        %v523 = vmax.f32 %v469, 0.0
        %v524 = vmax.f32 %v474, 0.0
        %v525 = vmax.f32 %v477, 0.0
        %v526 = vmax.f32 %v482, 0.0
        %v527 = vmax.f32 %v485, 0.0
        %v528 = vmax.f32 %v490, 0.0
        %v529 = vmax.f32 %v493, 0.0
        %v530 = vmax.f32 %v498, 0.0
        %v531 = vmax.f32 %v501, 0.0
        %v532 = vmax.f32 %v506, 0.0
        %v533 = vmax.f32 %v509, 0.0
        %v534 = vmax.f32 %v514, 0.0
        %v535 = vmax.f32 %v517, 0.0
        %v536 = vpack.c.bf16 %v521, %v520
        %v537 = vpack.c.bf16 %v523, %v522
        %v538 = vpack.c.bf16 %v525, %v524
        %v539 = vpack.c.bf16 %v527, %v526
        %v540 = vpack.c.bf16 %v529, %v528
        %v541 = vpack.c.bf16 %v531, %v530
        %v542 = vpack.c.bf16 %v533, %v532
        %v543 = vpack.c.bf16 %v535, %v534
        %v544 = vld [vmem:[%s3] sm:$0xff]
        %v545 = vld [vmem:[%s3 + $0x8] sm:$0xff]
        %v546 = vld [vmem:[%s3 + $0x10] sm:$0xff]
        %v547 = vld [vmem:[%s3 + $0x18] sm:$0xff]
        %v548 = vld [vmem:[%s3 + $0x20] sm:$0xff]
        %v549 = vld [vmem:[%s3 + $0x28] sm:$0xff]
        %v550 = vld [vmem:[%s3 + $0x30] sm:$0xff]
        %v551 = vld [vmem:[%s3 + $0x38] sm:$0xff]
        %v552 = vld [vmem:[%s3 + $0x40] sm:$0xff]
        %v553 = vld [vmem:[%s3 + $0x48] sm:$0xff]
        %v554 = vld [vmem:[%s3 + $0x50] sm:$0xff]
        %v555 = vld [vmem:[%s3 + $0x58] sm:$0xff]
        %v556 = vld [vmem:[%s3 + $0x60] sm:$0xff]
        %v557 = vld [vmem:[%s3 + $0x68] sm:$0xff]
        %v558 = vld [vmem:[%s3 + $0x70] sm:$0xff]
        %v559 = vld [vmem:[%s3 + $0x78] sm:$0xff]
        %v560 = vld [vmem:[%s4] sm:$0x3]
        %v562 = vlaneseq
        %v563 = vshrl.u32 %v562, 7
        %v564 = vsub.s32 0, %v563
        %v565 = vrot.slane %v560, %v564
        %v566 = vlaneseq
        %v567 = vshrl.u32 %v566, 7
        %v568 = vsub.s32 1, %v567
        %v569 = vrot.slane %v560, %v568
        %v588 = vunpack.c.l.b16 %v544
        %v589 = vunpack.c.h.b16 %v544
        %v590 = vunpack.c.l.b16 %v545
        %v591 = vunpack.c.h.b16 %v545
        %v592 = vunpack.c.l.b16 %v546
        %v593 = vunpack.c.h.b16 %v546
        %v594 = vunpack.c.l.b16 %v547
        %v595 = vunpack.c.h.b16 %v547
        %v596 = vunpack.c.l.b16 %v548
        %v597 = vunpack.c.h.b16 %v548
        %v598 = vunpack.c.l.b16 %v549
        %v599 = vunpack.c.h.b16 %v549
        %v600 = vunpack.c.l.b16 %v550
        %v601 = vunpack.c.h.b16 %v550
        %v602 = vunpack.c.l.b16 %v551
        %v603 = vunpack.c.h.b16 %v551
        %v604 = vunpack.c.l.b16 %v552
        %v605 = vunpack.c.h.b16 %v552
        %v606 = vunpack.c.l.b16 %v553
        %v607 = vunpack.c.h.b16 %v553
        %v608 = vunpack.c.l.b16 %v554
        %v609 = vunpack.c.h.b16 %v554
        %v610 = vunpack.c.l.b16 %v555
        %v611 = vunpack.c.h.b16 %v555
        %v612 = vunpack.c.l.b16 %v556
        %v613 = vunpack.c.h.b16 %v556
        %v614 = vunpack.c.l.b16 %v557
        %v615 = vunpack.c.h.b16 %v557
        %v616 = vunpack.c.l.b16 %v558
        %v617 = vunpack.c.h.b16 %v558
        %v618 = vunpack.c.l.b16 %v559
        %v619 = vunpack.c.h.b16 %v559
        %v620 = vpack.c.b16 %v590, %v588
        %v621 = vpack.c.b16 %v591, %v589
        %v622 = vpack.c.b16 %v594, %v592
        %v623 = vpack.c.b16 %v595, %v593
        %v624 = vpack.c.b16 %v598, %v596
        %v625 = vpack.c.b16 %v599, %v597
        %v626 = vpack.c.b16 %v602, %v600
        %v627 = vpack.c.b16 %v603, %v601
        %v628 = vpack.c.b16 %v606, %v604
        %v629 = vpack.c.b16 %v607, %v605
        %v630 = vpack.c.b16 %v610, %v608
        %v631 = vpack.c.b16 %v611, %v609
        %v632 = vpack.c.b16 %v614, %v612
        %v633 = vpack.c.b16 %v615, %v613
        %v634 = vpack.c.b16 %v618, %v616
        %v635 = vpack.c.b16 %v619, %v617
        %652 = vmatprep.subr.bf16.mxu0 %v621
        %653 = vmatpush1.bf16.msra.mxu0 %v620
        %654 = vmatprep.subr.bf16.mxu0 %v623
        %655 = vmatpush1.bf16.msra.mxu0 %v622
        %656 = vmatprep.subr.bf16.mxu0 %v625
        %657 = vmatpush1.bf16.msra.mxu0 %v624
        %658 = vmatprep.subr.bf16.mxu0 %v627
        %659 = vmatpush1.bf16.msra.mxu0 %v626
        %660 = vmatprep.subr.bf16.mxu0 %v629
        %661 = vmatpush1.bf16.msra.mxu0 %v628
        %662 = vmatprep.subr.bf16.mxu0 %v631
        %663 = vmatpush1.bf16.msra.mxu0 %v630
        %664 = vmatprep.subr.bf16.mxu0 %v633
        %665 = vmatpush1.bf16.msra.mxu0 %v632
        %666 = vmatprep.subr.bf16.mxu0 %v635
        %667 = vmatpush1.bf16.msra.mxu0 %v634
        %668 = vmatprep.subr.bf16.mxu0 0
        %669 = vmatpush1.bf16.msra.mxu0 0
        %670 = vmatprep.subr.bf16.mxu0 0
        %671 = vmatpush1.bf16.msra.mxu0 0
        %672 = vmatprep.subr.bf16.mxu0 0
        %673 = vmatpush1.bf16.msra.mxu0 0
        %674 = vmatprep.subr.bf16.mxu0 0
        %675 = vmatpush1.bf16.msra.mxu0 0
        %676 = vmatprep.subr.bf16.mxu0 0
        %677 = vmatpush1.bf16.msra.mxu0 0
        %678 = vmatprep.subr.bf16.mxu0 0
        %679 = vmatpush1.bf16.msra.mxu0 0
        %680 = vmatprep.subr.bf16.mxu0 0
        %681 = vmatpush1.bf16.msra.mxu0 0
        %682 = vmatprep.subr.bf16.mxu0 0
        %683 = vmatpush1.bf16.msra.mxu0 0
        %684 = vmatprep.mubr.bf16.mxu0 0
        %685 = vmatmul.mubr.bf16.gmra.mrb[0].mxu0 %v536
        %v686 = vpop.f32.mrb[0].mxu0
        %v687 = vadd.f32 %v565, %v686
        %v688 = vpop.f32.mrb[0].mxu0
        %v689 = vadd.f32 %v569, %v688
        %v690 = vpop.f32.mrb[0].mxu0
        %v691 = vadd.f32 %v565, %v690
        %v692 = vpop.f32.mrb[0].mxu0
        %v693 = vadd.f32 %v569, %v692
        %694 = vmatprep.mubr.bf16.mxu0 0
        %695 = vmatmul.mubr.bf16.gmra.mrb[0].mxu0 %v537
        %v696 = vpop.f32.mrb[0].mxu0
        %v697 = vadd.f32 %v565, %v696
        %v698 = vpop.f32.mrb[0].mxu0
        %v699 = vadd.f32 %v569, %v698
        %v700 = vpop.f32.mrb[0].mxu0
        %v701 = vadd.f32 %v565, %v700
        %v702 = vpop.f32.mrb[0].mxu0
        %v703 = vadd.f32 %v569, %v702
        %704 = vmatprep.mubr.bf16.mxu0 0
        %705 = vmatmul.mubr.bf16.gmra.mrb[0].mxu0 %v538
        %v706 = vpop.f32.mrb[0].mxu0
        %v707 = vadd.f32 %v565, %v706
        %v708 = vpop.f32.mrb[0].mxu0
        %v709 = vadd.f32 %v569, %v708
        %v710 = vpop.f32.mrb[0].mxu0
        %v711 = vadd.f32 %v565, %v710
        %v712 = vpop.f32.mrb[0].mxu0
        %v713 = vadd.f32 %v569, %v712
        %714 = vmatprep.mubr.bf16.mxu0 0
        %715 = vmatmul.mubr.bf16.gmra.mrb[0].mxu0 %v539
        %v716 = vpop.f32.mrb[0].mxu0
        %v717 = vadd.f32 %v565, %v716
        %v718 = vpop.f32.mrb[0].mxu0
        %v719 = vadd.f32 %v569, %v718
        %v720 = vpop.f32.mrb[0].mxu0
        %v721 = vadd.f32 %v565, %v720
        %v722 = vpop.f32.mrb[0].mxu0
        %v723 = vadd.f32 %v569, %v722
        %724 = vmatprep.mubr.bf16.mxu0 0
        %725 = vmatmul.mubr.bf16.gmra.mrb[0].mxu0 %v540
        %v726 = vpop.f32.mrb[0].mxu0
        %v727 = vadd.f32 %v565, %v726
        %v728 = vpop.f32.mrb[0].mxu0
        %v729 = vadd.f32 %v569, %v728
        %v730 = vpop.f32.mrb[0].mxu0
        %v731 = vadd.f32 %v565, %v730
        %v732 = vpop.f32.mrb[0].mxu0
        %v733 = vadd.f32 %v569, %v732
        %734 = vmatprep.mubr.bf16.mxu0 0
        %735 = vmatmul.mubr.bf16.gmra.mrb[0].mxu0 %v541
        %v736 = vpop.f32.mrb[0].mxu0
        %v737 = vadd.f32 %v565, %v736
        %v738 = vpop.f32.mrb[0].mxu0
        %v739 = vadd.f32 %v569, %v738
        %v740 = vpop.f32.mrb[0].mxu0
        %v741 = vadd.f32 %v565, %v740
        %v742 = vpop.f32.mrb[0].mxu0
        %v743 = vadd.f32 %v569, %v742
        %744 = vmatprep.mubr.bf16.mxu0 0
        %745 = vmatmul.mubr.bf16.gmra.mrb[0].mxu0 %v542
        %v746 = vpop.f32.mrb[0].mxu0
        %v747 = vadd.f32 %v565, %v746
        %v748 = vpop.f32.mrb[0].mxu0
        %v749 = vadd.f32 %v569, %v748
        %v750 = vpop.f32.mrb[0].mxu0
        %v751 = vadd.f32 %v565, %v750
        %v752 = vpop.f32.mrb[0].mxu0
        %v753 = vadd.f32 %v569, %v752
        %754 = vmatprep.mubr.bf16.mxu0 0
        %755 = vmatmul.mubr.bf16.gmra.mrb[0].mxu0 %v543
        %v756 = vpop.f32.mrb[0].mxu0
        %v757 = vadd.f32 %v565, %v756
        %v758 = vpop.f32.mrb[0].mxu0
        %v759 = vadd.f32 %v569, %v758
        %v760 = vpop.f32.mrb[0].mxu0
        %v761 = vadd.f32 %v565, %v760
        %v762 = vpop.f32.mrb[0].mxu0
        %v763 = vadd.f32 %v569, %v762
        %764 = vdwg.mxu0
        %v765 = vmax.f32 %v687, 0.0
        %v766 = vmax.f32 %v689, 0.0
        %v767 = vmax.f32 %v691, 0.0
        %v768 = vmax.f32 %v693, 0.0
        %v769 = vmax.f32 %v697, 0.0
        %v770 = vmax.f32 %v699, 0.0
        %v771 = vmax.f32 %v701, 0.0
        %v772 = vmax.f32 %v703, 0.0
        %v773 = vmax.f32 %v707, 0.0
        %v774 = vmax.f32 %v709, 0.0
        %v775 = vmax.f32 %v711, 0.0
        %v776 = vmax.f32 %v713, 0.0
        %v777 = vmax.f32 %v717, 0.0
        %v778 = vmax.f32 %v719, 0.0
        %v779 = vmax.f32 %v721, 0.0
        %v780 = vmax.f32 %v723, 0.0
        %v781 = vmax.f32 %v727, 0.0
        %v782 = vmax.f32 %v729, 0.0
        %v783 = vmax.f32 %v731, 0.0
        %v784 = vmax.f32 %v733, 0.0
        %v785 = vmax.f32 %v737, 0.0
        %v786 = vmax.f32 %v739, 0.0
        %v787 = vmax.f32 %v741, 0.0
        %v788 = vmax.f32 %v743, 0.0
        %v789 = vmax.f32 %v747, 0.0
        %v790 = vmax.f32 %v749, 0.0
        %v791 = vmax.f32 %v751, 0.0
        %v792 = vmax.f32 %v753, 0.0
        %v793 = vmax.f32 %v757, 0.0
        %v794 = vmax.f32 %v759, 0.0
        %v795 = vmax.f32 %v761, 0.0
        %v796 = vmax.f32 %v763, 0.0
        %v797 = vpack.c.bf16 %v767, %v765
        %v798 = vpack.c.bf16 %v768, %v766
        %v799 = vpack.c.bf16 %v771, %v769
        %v800 = vpack.c.bf16 %v772, %v770
        %v801 = vpack.c.bf16 %v775, %v773
        %v802 = vpack.c.bf16 %v776, %v774
        %v803 = vpack.c.bf16 %v779, %v777
        %v804 = vpack.c.bf16 %v780, %v778
        %v805 = vpack.c.bf16 %v783, %v781
        %v806 = vpack.c.bf16 %v784, %v782
        %v807 = vpack.c.bf16 %v787, %v785
        %v808 = vpack.c.bf16 %v788, %v786
        %v809 = vpack.c.bf16 %v791, %v789
        %v810 = vpack.c.bf16 %v792, %v790
        %v811 = vpack.c.bf16 %v795, %v793
        %v812 = vpack.c.bf16 %v796, %v794
        %v813 = vld [vmem:[%s5] sm:$0xf]
        %v814 = vld [vmem:[%s5 + $0x4] sm:$0xf]
        %v815 = vld [vmem:[%s5 + $0x8] sm:$0xf]
        %v816 = vld [vmem:[%s5 + $0xc] sm:$0xf]
        %v817 = vld [vmem:[%s5 + $0x10] sm:$0xf]
        %v818 = vld [vmem:[%s5 + $0x14] sm:$0xf]
        %v819 = vld [vmem:[%s5 + $0x18] sm:$0xf]
        %v820 = vld [vmem:[%s5 + $0x1c] sm:$0xf]
        %v821 = vld [vmem:[%s5 + $0x20] sm:$0xf]
        %v822 = vld [vmem:[%s5 + $0x24] sm:$0xf]
        %v823 = vld [vmem:[%s5 + $0x28] sm:$0xf]
        %v824 = vld [vmem:[%s5 + $0x2c] sm:$0xf]
        %v825 = vld [vmem:[%s5 + $0x30] sm:$0xf]
        %v826 = vld [vmem:[%s5 + $0x34] sm:$0xf]
        %v827 = vld [vmem:[%s5 + $0x38] sm:$0xf]
        %v828 = vld [vmem:[%s5 + $0x3c] sm:$0xf]
        %v829 = vld [vmem:[%s5 + $0x40] sm:$0xf]
        %v830 = vld [vmem:[%s5 + $0x44] sm:$0xf]
        %v831 = vld [vmem:[%s5 + $0x48] sm:$0xf]
        %v832 = vld [vmem:[%s5 + $0x4c] sm:$0xf]
        %v833 = vld [vmem:[%s5 + $0x50] sm:$0xf]
        %v834 = vld [vmem:[%s5 + $0x54] sm:$0xf]
        %v835 = vld [vmem:[%s5 + $0x58] sm:$0xf]
        %v836 = vld [vmem:[%s5 + $0x5c] sm:$0xf]
        %v837 = vld [vmem:[%s5 + $0x60] sm:$0xf]
        %v838 = vld [vmem:[%s5 + $0x64] sm:$0xf]
        %v839 = vld [vmem:[%s5 + $0x68] sm:$0xf]
        %v840 = vld [vmem:[%s5 + $0x6c] sm:$0xf]
        %v841 = vld [vmem:[%s5 + $0x70] sm:$0xf]
        %v842 = vld [vmem:[%s5 + $0x74] sm:$0xf]
        %v843 = vld [vmem:[%s5 + $0x78] sm:$0xf]
        %v844 = vld [vmem:[%s5 + $0x7c] sm:$0xf]
        %v845 = vld [vmem:[%s6] sm:$0x1]
        %v847 = vlaneseq
        %v848 = vshrl.u32 %v847, 7
        %v849 = vsub.s32 0, %v848
        %v850 = vrot.slane %v845, %v849
        %v884 = vunpack.c.l.b16 %v813
        %v885 = vunpack.c.l.b16 %v814
        %v886 = vunpack.c.l.b16 %v815
        %v887 = vunpack.c.l.b16 %v816
        %v888 = vunpack.c.l.b16 %v817
        %v889 = vunpack.c.l.b16 %v818
        %v890 = vunpack.c.l.b16 %v819
        %v891 = vunpack.c.l.b16 %v820
        %v892 = vunpack.c.l.b16 %v821
        %v893 = vunpack.c.l.b16 %v822
        %v894 = vunpack.c.l.b16 %v823
        %v895 = vunpack.c.l.b16 %v824
        %v896 = vunpack.c.l.b16 %v825
        %v897 = vunpack.c.l.b16 %v826
        %v898 = vunpack.c.l.b16 %v827
        %v899 = vunpack.c.l.b16 %v828
        %v900 = vunpack.c.l.b16 %v829
        %v901 = vunpack.c.l.b16 %v830
        %v902 = vunpack.c.l.b16 %v831
        %v903 = vunpack.c.l.b16 %v832
        %v904 = vunpack.c.l.b16 %v833
        %v905 = vunpack.c.l.b16 %v834
        %v906 = vunpack.c.l.b16 %v835
        %v907 = vunpack.c.l.b16 %v836
        %v908 = vunpack.c.l.b16 %v837
        %v909 = vunpack.c.l.b16 %v838
        %v910 = vunpack.c.l.b16 %v839
        %v911 = vunpack.c.l.b16 %v840
        %v912 = vunpack.c.l.b16 %v841
        %v913 = vunpack.c.l.b16 %v842
        %v914 = vunpack.c.l.b16 %v843
        %v915 = vunpack.c.l.b16 %v844
        %v916 = vpack.c.b16 %v885, %v884
        %v917 = vpack.c.b16 %v887, %v886
        %v918 = vpack.c.b16 %v889, %v888
        %v919 = vpack.c.b16 %v891, %v890
        %v920 = vpack.c.b16 %v893, %v892
        %v921 = vpack.c.b16 %v895, %v894
        %v922 = vpack.c.b16 %v897, %v896
        %v923 = vpack.c.b16 %v899, %v898
        %v924 = vpack.c.b16 %v901, %v900
        %v925 = vpack.c.b16 %v903, %v902
        %v926 = vpack.c.b16 %v905, %v904
        %v927 = vpack.c.b16 %v907, %v906
        %v928 = vpack.c.b16 %v909, %v908
        %v929 = vpack.c.b16 %v911, %v910
        %v930 = vpack.c.b16 %v913, %v912
        %v931 = vpack.c.b16 %v915, %v914
        %948 = vmatprep.subr.bf16.mxu0 0
        %949 = vmatpush1.bf16.msra.mxu0 %v916
        %950 = vmatprep.subr.bf16.mxu0 0
        %951 = vmatpush1.bf16.msra.mxu0 %v917
        %952 = vmatprep.subr.bf16.mxu0 0
        %953 = vmatpush1.bf16.msra.mxu0 %v918
        %954 = vmatprep.subr.bf16.mxu0 0
        %955 = vmatpush1.bf16.msra.mxu0 %v919
        %956 = vmatprep.subr.bf16.mxu0 0
        %957 = vmatpush1.bf16.msra.mxu0 %v920
        %958 = vmatprep.subr.bf16.mxu0 0
        %959 = vmatpush1.bf16.msra.mxu0 %v921
        %960 = vmatprep.subr.bf16.mxu0 0
        %961 = vmatpush1.bf16.msra.mxu0 %v922
        %962 = vmatprep.subr.bf16.mxu0 0
        %963 = vmatpush1.bf16.msra.mxu0 %v923
        %964 = vmatprep.subr.bf16.mxu0 0
        %965 = vmatpush1.bf16.msra.mxu0 %v924
        %966 = vmatprep.subr.bf16.mxu0 0
        %967 = vmatpush1.bf16.msra.mxu0 %v925
        %968 = vmatprep.subr.bf16.mxu0 0
        %969 = vmatpush1.bf16.msra.mxu0 %v926
        %970 = vmatprep.subr.bf16.mxu0 0
        %971 = vmatpush1.bf16.msra.mxu0 %v927
        %972 = vmatprep.subr.bf16.mxu0 0
        %973 = vmatpush1.bf16.msra.mxu0 %v928
        %974 = vmatprep.subr.bf16.mxu0 0
        %975 = vmatpush1.bf16.msra.mxu0 %v929
        %976 = vmatprep.subr.bf16.mxu0 0
        %977 = vmatpush1.bf16.msra.mxu0 %v930
        %978 = vmatprep.subr.bf16.mxu0 0
        %979 = vmatpush1.bf16.msra.mxu0 %v931
        %980 = vmatprep.mubr.bf16.mxu0 %v798
        %981 = vmatmul.mubr.bf16.gmra.mrb[0].mxu0 %v797
        %v982 = vpop.f32.mrb[0].mxu0
        %v983 = vadd.f32 %v850, %v982
        %v984 = vpop.f32.mrb[0].mxu0
        %v985 = vpop.f32.mrb[0].mxu0
        %v986 = vadd.f32 %v850, %v985
        %v987 = vpop.f32.mrb[0].mxu0
        %988 = vmatprep.mubr.bf16.mxu0 %v800
        %989 = vmatmul.mubr.bf16.gmra.mrb[0].mxu0 %v799
        %v990 = vpop.f32.mrb[0].mxu0
        %v991 = vadd.f32 %v850, %v990
        %v992 = vpop.f32.mrb[0].mxu0
        %v993 = vpop.f32.mrb[0].mxu0
        %v994 = vadd.f32 %v850, %v993
        %v995 = vpop.f32.mrb[0].mxu0
        %996 = vmatprep.mubr.bf16.mxu0 %v802
        %997 = vmatmul.mubr.bf16.gmra.mrb[0].mxu0 %v801
        %v998 = vpop.f32.mrb[0].mxu0
        %v999 = vadd.f32 %v850, %v998
        %v1000 = vpop.f32.mrb[0].mxu0
        %v1001 = vpop.f32.mrb[0].mxu0
        %v1002 = vadd.f32 %v850, %v1001
        %v1003 = vpop.f32.mrb[0].mxu0
        %1004 = vmatprep.mubr.bf16.mxu0 %v804
        %1005 = vmatmul.mubr.bf16.gmra.mrb[0].mxu0 %v803
        %v1006 = vpop.f32.mrb[0].mxu0
        %v1007 = vadd.f32 %v850, %v1006
        %v1008 = vpop.f32.mrb[0].mxu0
        %v1009 = vpop.f32.mrb[0].mxu0
        %v1010 = vadd.f32 %v850, %v1009
        %v1011 = vpop.f32.mrb[0].mxu0
        %1012 = vmatprep.mubr.bf16.mxu0 %v806
        %1013 = vmatmul.mubr.bf16.gmra.mrb[0].mxu0 %v805
        %v1014 = vpop.f32.mrb[0].mxu0
        %v1015 = vadd.f32 %v850, %v1014
        %v1016 = vpop.f32.mrb[0].mxu0
        %v1017 = vpop.f32.mrb[0].mxu0
        %v1018 = vadd.f32 %v850, %v1017
        %v1019 = vpop.f32.mrb[0].mxu0
        %1020 = vmatprep.mubr.bf16.mxu0 %v808
        %1021 = vmatmul.mubr.bf16.gmra.mrb[0].mxu0 %v807
        %v1022 = vpop.f32.mrb[0].mxu0
        %v1023 = vadd.f32 %v850, %v1022
        %v1024 = vpop.f32.mrb[0].mxu0
        %v1025 = vpop.f32.mrb[0].mxu0
        %v1026 = vadd.f32 %v850, %v1025
        %v1027 = vpop.f32.mrb[0].mxu0
        %1028 = vmatprep.mubr.bf16.mxu0 %v810
        %1029 = vmatmul.mubr.bf16.gmra.mrb[0].mxu0 %v809
        %v1030 = vpop.f32.mrb[0].mxu0
        %v1031 = vadd.f32 %v850, %v1030
        %v1032 = vpop.f32.mrb[0].mxu0
        %v1033 = vpop.f32.mrb[0].mxu0
        %v1034 = vadd.f32 %v850, %v1033
        %v1035 = vpop.f32.mrb[0].mxu0
        %1036 = vmatprep.mubr.bf16.mxu0 %v812
        %1037 = vmatmul.mubr.bf16.gmra.mrb[0].mxu0 %v811
        %v1038 = vpop.f32.mrb[0].mxu0
        %v1039 = vadd.f32 %v850, %v1038
        %v1040 = vpop.f32.mrb[0].mxu0
        %v1041 = vpop.f32.mrb[0].mxu0
        %v1042 = vadd.f32 %v850, %v1041
        %v1043 = vpop.f32.mrb[0].mxu0
        %1044 = vdwg.mxu0
        %v1045 = vmax.f32 %v983, 0.0
        %v1046 = vmax.f32 %v986, 0.0
        %v1047 = vmax.f32 %v991, 0.0
        %v1048 = vmax.f32 %v994, 0.0
        %v1049 = vmax.f32 %v999, 0.0
        %v1050 = vmax.f32 %v1002, 0.0
        %v1051 = vmax.f32 %v1007, 0.0
        %v1052 = vmax.f32 %v1010, 0.0
        %v1053 = vmax.f32 %v1015, 0.0
        %v1054 = vmax.f32 %v1018, 0.0
        %v1055 = vmax.f32 %v1023, 0.0
        %v1056 = vmax.f32 %v1026, 0.0
        %v1057 = vmax.f32 %v1031, 0.0
        %v1058 = vmax.f32 %v1034, 0.0
        %v1059 = vmax.f32 %v1039, 0.0
        %v1060 = vmax.f32 %v1042, 0.0
        %v1061 = vld [vmem:[%s7] sm:$0xf]
        %v1062 = vpack.c.bf16 %v1046, %v1045
        %v1063 = vpack.c.bf16 %v1048, %v1047
        %v1064 = vpack.c.bf16 %v1050, %v1049
        %v1065 = vpack.c.bf16 %v1052, %v1051
        %v1066 = vpack.c.bf16 %v1054, %v1053
        %v1067 = vpack.c.bf16 %v1056, %v1055
        %v1068 = vpack.c.bf16 %v1058, %v1057
        %v1069 = vpack.c.bf16 %v1060, %v1059
        %v1071 = vsel %vm398, %v1061, 0
        %v1074 = vsel %vm398, %v1062, 0
        %v1077 = vsel %vm398, %v1063, 0
        %v1080 = vsel %vm398, %v1064, 0
        %v1083 = vsel %vm398, %v1065, 0
        %v1086 = vsel %vm398, %v1066, 0
        %v1089 = vsel %vm398, %v1067, 0
        %v1092 = vsel %vm398, %v1068, 0
        %v1095 = vsel %vm398, %v1069, 0
        %1097 = vmatprep.subr.bf16.mxu0 0
        %1098 = vmatpush1.bf16.xpose.msra.mxu0 %v1074
        %1099 = vmatprep.subr.bf16.mxu0 0
        %1100 = vmatpush1.bf16.xpose.msra.mxu0 %v1077
        %1101 = vmatprep.subr.bf16.mxu0 0
        %1102 = vmatpush1.bf16.xpose.msra.mxu0 %v1080
        %1103 = vmatprep.subr.bf16.mxu0 0
        %1104 = vmatpush1.bf16.xpose.msra.mxu0 %v1083
        %1105 = vmatprep.subr.bf16.mxu0 0
        %1106 = vmatpush1.bf16.xpose.msra.mxu0 %v1086
        %1107 = vmatprep.subr.bf16.mxu0 0
        %1108 = vmatpush1.bf16.xpose.msra.mxu0 %v1089
        %1109 = vmatprep.subr.bf16.mxu0 0
        %1110 = vmatpush1.bf16.xpose.msra.mxu0 %v1092
        %1111 = vmatprep.subr.bf16.mxu0 0
        %1112 = vmatpush1.bf16.xpose.msra.mxu0 %v1095
        %1113 = vmatprep.subr.bf16.mxu0 0
        %1114 = vmatpush1.bf16.xpose.msra.mxu0 0
        %1115 = vmatprep.subr.bf16.mxu0 0
        %1116 = vmatpush1.bf16.xpose.msra.mxu0 0
        %1117 = vmatprep.subr.bf16.mxu0 0
        %1118 = vmatpush1.bf16.xpose.msra.mxu0 0
        %1119 = vmatprep.subr.bf16.mxu0 0
        %1120 = vmatpush1.bf16.xpose.msra.mxu0 0
        %1121 = vmatprep.subr.bf16.mxu0 0
        %1122 = vmatpush1.bf16.xpose.msra.mxu0 0
        %1123 = vmatprep.subr.bf16.mxu0 0
        %1124 = vmatpush1.bf16.xpose.msra.mxu0 0
        %1125 = vmatprep.subr.bf16.mxu0 0
        %1126 = vmatpush1.bf16.xpose.msra.mxu0 0
        %1127 = vmatprep.subr.bf16.mxu0 0
        %1128 = vmatpush1.bf16.xpose.msra.mxu0 0
        %1129 = vmatprep.mubr.bf16.mxu0 0
        %1130 = vmatmul.mubr.bf16.gmra.mrb[0].mxu0 %v1071
        %v1131 = vpop.f32.mrb[0].mxu0
        %v1132 = vadd.f32 0.0, %v1131
        %v1133 = vpop.f32.mrb[0].mxu0
        %v1134 = vpop.f32.mrb[0].mxu0
        %v1135 = vpop.f32.mrb[0].mxu0
        %1136 = vdwg.mxu0
        %v1137 = vld [vmem:[#allocation2] sm:$0x1]
        %1139 = vset.pattern.permute.xlu0 0
        %1140 = vperm.xlu0 %1139, %v1137
        %v1141 = vpop.permute.xlu0 %1140
        %v1143 = vlaneseq
        %v1144 = vshrl.u32 %v1143, 7
        %v1145 = vsub.s32 0, %v1144
        %v1146 = vrot.slane %v1141, %v1145
        %v1147 = vadd.f32 %v1132, %v1146
        %1148 = vst [vmem:[%s327] sm:$0x1] %v1147
        %s1149 = sand.u32 %s227, 1
        %s1150 = scalar_lea.sflag [#allocation4], %s1149
        %s1151 = sand.u32 %s227, 1
        %s1152 = scalar_lea.vmem [#allocation3], %s1151
        // Predicated region
        $region57: #{tpu_custom_call.1} parent=55 // pred_check
          %p1153 = pneg %p237
        $region58: #{tpu_custom_call.1} parent=55 // pred_check_branch
          %1155 = sbr.rel (%p1153) target = $region60
        $region59: #{tpu_custom_call.1} parent=55 // pred_region
          %s1157 = ssub.s32 16, 16
          %1158 = vsyncadd %s1150, %s1157
          %s1159 = smul.addr %s25, 16
          %s1160 = scalar_lea.hbm %s9, %s1159
          %s1162 = sshll.u32 %s1152, 4
          %s1163 = int_to_ptr.vmem [resolvable:$true] %s1162
          %1165 = dma.vmem_to_hbm [thread:$0]  %s1163, 16, %s1160, %s1150
        $region60: #{tpu_custom_call.1} parent=55 // pred_fallthru
          _
      $region56: #{tpu_custom_call.1} parent=5 // pred_fallthru
        _
      %p1166 = scmp.le.s32.totalorder 2, %s20
      // Predicated region
      $region61: #{tpu_custom_call.1} parent=5 // pred_check
        %p1167 = pneg %p1166
      $region62: #{tpu_custom_call.1} parent=5 // pred_check_branch
        %1169 = sbr.rel (%p1167) target = $region64
      $region63: #{tpu_custom_call.1} parent=5 // pred_region
        %s1170 = ssub.s32 %s20, 2
        // Predicated region
        $region65: #{tpu_custom_call.1} parent=63 // pred_check
          %p1171 = pneg %p243
        $region66: #{tpu_custom_call.1} parent=63 // pred_check_branch
          %1173 = sbr.rel (%p1171) target = $region68
        $region67: #{tpu_custom_call.1} parent=63 // pred_region
          %s1174 = sand.u32 %s228, 1
          %s1175 = scalar_lea.sflag [#allocation4], %s1174
          %s1176 = sand.u32 %s228, 1
          %s1177 = scalar_lea.vmem [#allocation3], %s1176
          %1178 = dma.done %s1175, 16
        $region68: #{tpu_custom_call.1} parent=63 // pred_fallthru
          _
      $region64: #{tpu_custom_call.1} parent=5 // pred_fallthru
        _
    $region6: #{tpu_custom_call.1} parent=1 // loop_footer
      %s24 = sadd.s32 1, %s20
    $region7: #{tpu_custom_call.1} parent=1 // loop_footer_branch
      %19 = sbr.rel target = $region3
    $region8: #{tpu_custom_call.1} parent=1 // loop_exit
      _
    %1179 = vsyncpa [#allocation4], 1
    %s1180 = scalar_lea.sflag [#allocation4], 1
    %1181 = vsyncpa %s1180, 1

</llo_original>
